<compile_context>
chip_gen: v6e
topology: v6e:2x2x1
jax: 0.10.0
libtpu: 0.0.40
codegen_flags: <defaults>
</compile_context>

<pallas_src>
import functools

import jax
import jax.numpy as jnp
from jax.experimental import pallas as pl
from jax.experimental.pallas import tpu as pltpu

ALPHA = 0.5
BETA = 0.5


def _second_diff_matrix(n):
    # (M @ y)[f] = y[f-1] - 2*y[f] + y[f+1], out-of-range treated as 0 (symmetric).
    return (-2.0 * jnp.eye(n, dtype=jnp.float32)
            + jnp.eye(n, k=1, dtype=jnp.float32)
            + jnp.eye(n, k=-1, dtype=jnp.float32))


def _combined_kernel(x_ref, wcat_ref, w1bc_ref, b1_ref, w2_ref, b2_ref,
                     mprev_ref, mnext_ref, out_ref, *, n_features, hidden_dim):
    F, H = n_features, hidden_dim
    x = x_ref[...]                     # (F, M): features on sublanes, B*S on lanes
    M = x.shape[-1]

    # ---- one wide MXU call:  [BETA*D ; T_feat ; W1a^T] @ x  ->  (2F+H, M) --------
    y = jnp.dot(wcat_ref[...], x, preferred_element_type=jnp.float32)
    ind_beta = y[:F, :]                # BETA * indicator_diff   (sublane-aligned views)
    x_tf = y[F:2 * F, :]               # feature-axis second difference of x
    h_a = y[2 * F:, :]                 # W1[:F]^T @ x contribution to fusion layer 1

    # ---- seq-axis second differences: XLU lane rotates + precomputed masks -------
    mprev = mprev_ref[...]             # (1, M): 1.0 where seq pos != 0
    mnext = mnext_ref[...]             # (1, M): 1.0 where seq pos != S-1

    def shift_up(a):                   # a[:, m] <- a[:, m+1] within a sequence, else 0
        return pltpu.roll(a, M - 1, axis=1) * mnext

    def shift_dn(a):                   # a[:, m] <- a[:, m-1] within a sequence, else 0
        return pltpu.roll(a, 1, axis=1) * mprev

    # time_diff: interior seq positions only (boundary columns stay exactly zero).
    td = (shift_up(x) - 2.0 * x + shift_dn(x)) * (mnext * mprev)
    tmdo = ALPHA * td + ind_beta                                    # (F, M)
    # 3x3 zero-padded Laplacian = seq second diff of the feature second diff.
    lap = shift_up(x_tf) - 2.0 * x_tf + shift_dn(x_tf)              # (F, M)

    # ---- direct, sublane-tile-aligned sub-stores into the lane-dense slab --------
    # (H and F are multiples of 8, so every slice starts on an 8-sublane tile edge.)
    out_ref[H:H + F, :] = tmdo
    out_ref[H + F:H + 2 * F, :] = lap

    # ---- fusion MLP; reuse the [tmdo ; lap] slab just written (no concat copy) ---
    tl = out_ref[H:H + 2 * F, :]                                    # (2F, M)
    h = (h_a
         + jnp.dot(w1bc_ref[...], tl, preferred_element_type=jnp.float32)
         + b1_ref[...])
    h = jnp.maximum(h, 0.0)
    out_ref[:H, :] = (jnp.dot(w2_ref[...], h, preferred_element_type=jnp.float32)
                      + b2_ref[...])


def _tpu_vmem_capacity_bytes():
    # Generation-aware VMEM capacity (v5e/v6e: 128 MiB, v7x: 64 MiB per TC).
    try:
        cap = int(getattr(pltpu.get_tpu_info(), "vmem_capacity_bytes", 0))
        if cap > 0:
            return cap
    except Exception:
        pass
    return 64 * 1024 * 1024            # conservative default (v7x per-TC size)


def _choose_num_blocks(B, S, F, H, block_budget_bytes):
    """Blocks hold whole batches; lane dim must be a multiple of 128 (or the full
    extent); pick the largest block that fits the budget, but prefer >=2 blocks
    when there is enough work so v7x megacore can split the parallel axis."""
    Ctot = H + 2 * F
    # Per-column f32 bytes: double-buffered in+out blocks plus kernel temporaries
    # (y, td/tmdo/lap/x_tf, h, fused).
    bytes_per_col = 4 * (2 * (F + Ctot) + (2 * F + H) + 4 * F + 2 * H)
    max_cols = max(128, block_budget_bytes // bytes_per_col)

    valid = [n for n in range(1, B + 1)
             if B % n == 0 and (n == 1 or ((B // n) * S) % 128 == 0)]
    fitting = [n for n in valid if (B // n) * S <= max_cols] or [max(valid)]
    nblk = min(fitting)                          # fewest / largest blocks that fit
    multi = [n for n in fitting if n >= 2]
    if nblk == 1 and multi and B * S >= 256:     # keep both v7x TensorCores busy
        nblk = min(multi)
    return nblk


@jax.jit
def combined_feature_processor(x, wm, w1, b1, w2, b2):
    B, S, Fdim = x.shape
    H = w1.shape[1]
    Ctot = H + 2 * Fdim
    M = B * S

    # ---- parameter-only precompute, hoisted out of the kernel --------------------
    w = jax.nn.softmax(wm, axis=1)
    eye = jnp.eye(Fdim, dtype=bool)
    wz = jnp.where(eye, 0.0, w)                           # softmax weights, diag removed
    D = jnp.where(eye, jnp.sum(wz, axis=1)[:, None], -wz)  # indicator_diff = D @ x_vec
    tF = _second_diff_matrix(Fdim)                        # feature-axis Laplacian operator
    wcat_t = jnp.concatenate([BETA * D, tF, w1[:Fdim].T], axis=0)   # (2F+H, F)
    w1bc_t = w1[Fdim:].T                                  # (H, 2F): tmdo/lap rows of W1
    w2_t = w2.T                                           # (H, H)
    b1c = b1.reshape(H, 1).astype(jnp.float32)
    b2c = b2.reshape(H, 1).astype(jnp.float32)

    # Long B*S axis on lanes.
    x_t = x.reshape(M, Fdim).T                            # (F, M)

    vmem_cap = _tpu_vmem_capacity_bytes()
    block_budget = max(8 * 1024 * 1024, min(vmem_cap // 4, 32 * 1024 * 1024))
    nblk = _choose_num_blocks(B, S, Fdim, H, block_budget)
    cols_blk = (B // nblk) * S

    # Seq-boundary masks (S-periodic, identical for every block -> constant index_map).
    seq_pos = jnp.arange(cols_blk, dtype=jnp.int32) % S
    mprev = (seq_pos != 0).astype(jnp.float32).reshape(1, cols_blk)
    mnext = (seq_pos != S - 1).astype(jnp.float32).reshape(1, cols_blk)

    kernel = functools.partial(_combined_kernel, n_features=Fdim, hidden_dim=H)

    flops = M * (2 * Fdim * (2 * Fdim + H) + 4 * Fdim * H + 2 * H * H)
    bytes_accessed = 4 * (M * (Fdim + Ctot)
                          + nblk * ((2 * Fdim + H) * Fdim + 2 * Fdim * H + H * H
                                    + 2 * H + 2 * cols_blk))

    grid_spec = pltpu.PrefetchScalarGridSpec(
        num_scalar_prefetch=0,
        grid=(nblk,),
        in_specs=[
            pl.BlockSpec((Fdim, cols_blk), lambda i: (0, i)),        # x^T (lane-dense)
            pl.BlockSpec((2 * Fdim + H, Fdim), lambda i: (0, 0)),    # W_cat^T
            pl.BlockSpec((H, 2 * Fdim), lambda i: (0, 0)),           # W1[F:]^T
            pl.BlockSpec((H, 1), lambda i: (0, 0)),                  # b1
            pl.BlockSpec((H, H), lambda i: (0, 0)),                  # W2^T
            pl.BlockSpec((H, 1), lambda i: (0, 0)),                  # b2
            pl.BlockSpec((1, cols_blk), lambda i: (0, 0)),           # has_prev mask
            pl.BlockSpec((1, cols_blk), lambda i: (0, 0)),           # has_next mask
        ],
        out_specs=pl.BlockSpec((Ctot, cols_blk), lambda i: (0, i)),
    )

    out = pl.pallas_call(
        kernel,
        out_shape=jax.ShapeDtypeStruct((Ctot, M), jnp.float32),
        grid_spec=grid_spec,
        compiler_params=pltpu.CompilerParams(
            dimension_semantics=("parallel",),
            vmem_limit_bytes=int(min(vmem_cap * 3 // 4, 96 * 1024 * 1024))),
        cost_estimate=pl.CostEstimate(flops=flops, transcendentals=0,
                                      bytes_accessed=bytes_accessed),
    )(x_t, wcat_t, w1bc_t, b1c, w2_t, b2c, mprev, mnext)

    fused = out[:H].T.reshape(B, S, H)
    tmdo = out[H:H + Fdim].T.reshape(B, S, Fdim)
    lap = out[H + Fdim:].T.reshape(B, S, Fdim)
    return fused, tmdo, lap


def reference(x, wm, w1, b1, w2, b2):
    """Pure-JAX reference matching the PyTorch forward."""
    B, S, F = x.shape
    td = jnp.zeros_like(x)
    td = td.at[:, 1:-1, :].set(x[:, 2:, :] - 2.0 * x[:, 1:-1, :] + x[:, :-2, :])
    w = jax.nn.softmax(wm, axis=1)
    wz = jnp.where(jnp.eye(F, dtype=bool), 0.0, w)
    r = jnp.sum(wz, axis=1)
    ind = x * r[None, None, :] - jnp.einsum("bsj,ij->bsi", x, wz)
    tmdo = ALPHA * td + BETA * ind
    tS = _second_diff_matrix(S)
    tF = _second_diff_matrix(F)
    lap = jnp.einsum("st,btf->bsf", tS, jnp.einsum("bsg,gf->bsf", x, tF))
    comb = jnp.concatenate([x, tmdo, lap], axis=-1)
    h = jnp.maximum(comb @ w1 + b1, 0.0)
    fused = h @ w2 + b2
    return fused, tmdo, lap


if __name__ == "__main__":
    B, S, F, H = 2, 8, 8, 32  # batch, seq, input_dim (n_features), hidden_dim

    key = jax.random.PRNGKey(0)
    kx, kwm, kw1, kb1, kw2, kb2 = jax.random.split(key, 6)

    x = jax.random.normal(kx, (B, S, F), dtype=jnp.float32)
    # EnhancedTMDO.weight_matrix ~ randn(F, F)
    wm = jax.random.normal(kwm, (F, F), dtype=jnp.float32)
    # fusion: Linear(3F -> H), ReLU, Linear(H -> H); stored as (in, out) matrices
    w1 = jax.random.normal(kw1, (3 * F, H), dtype=jnp.float32) / jnp.sqrt(3.0 * F)
    b1 = jax.random.normal(kb1, (H,), dtype=jnp.float32) * 0.01
    w2 = jax.random.normal(kw2, (H, H), dtype=jnp.float32) / jnp.sqrt(float(H))
    b2 = jax.random.normal(kb2, (H,), dtype=jnp.float32) * 0.01

    fused, tmdo, lap = combined_feature_processor(x, wm, w1, b1, w2, b2)
    jax.block_until_ready((fused, tmdo, lap))

    rf, rt, rl = reference(x, wm, w1, b1, w2, b2)
    assert fused.shape == (B, S, H) and tmdo.shape == (B, S, F) and lap.shape == (B, S, F)
    assert jnp.allclose(fused, rf, atol=1e-2, rtol=1e-2)
    assert jnp.allclose(tmdo, rt, atol=1e-2, rtol=1e-2)
    assert jnp.allclose(lap, rl, atol=1e-2, rtol=1e-2)

    print("KERNEL_OK")
</pallas_src>

<mosaic_0001>
module attributes {stable_mosaic.version = 11 : i64} {
  func.func @_combined_kernel(%arg0: i32, %arg1: memref<8x16xf32, #tpu.memory_space<vmem>>, %arg2: memref<48x8xf32, #tpu.memory_space<vmem>>, %arg3: memref<32x16xf32, #tpu.memory_space<vmem>>, %arg4: memref<32x1xf32, #tpu.memory_space<vmem>>, %arg5: memref<32x32xf32, #tpu.memory_space<vmem>>, %arg6: memref<32x1xf32, #tpu.memory_space<vmem>>, %arg7: memref<1x16xf32, #tpu.memory_space<vmem>>, %arg8: memref<1x16xf32, #tpu.memory_space<vmem>>, %arg9: memref<48x16xf32, #tpu.memory_space<vmem>>) attributes {dimension_semantics = [#tpu.dimension_semantics<parallel>], iteration_bounds = array<i64: 1>, scalar_prefetch = 0 : i64, scratch_operands = 0 : i64, tpu.core_type = #tpu.core_type<tc>, window_params = [{transform_indices = @transform_0, window_bounds = array<i64: 8, 16>}, {pipeline_mode = #tpu.pipeline_mode<synchronous>, transform_indices = @transform_1, window_bounds = array<i64: 48, 8>}, {pipeline_mode = #tpu.pipeline_mode<synchronous>, transform_indices = @transform_2, window_bounds = array<i64: 32, 16>}, {pipeline_mode = #tpu.pipeline_mode<synchronous>, transform_indices = @transform_3, window_bounds = array<i64: 32, 1>}, {pipeline_mode = #tpu.pipeline_mode<synchronous>, transform_indices = @transform_4, window_bounds = array<i64: 32, 32>}, {pipeline_mode = #tpu.pipeline_mode<synchronous>, transform_indices = @transform_5, window_bounds = array<i64: 32, 1>}, {pipeline_mode = #tpu.pipeline_mode<synchronous>, transform_indices = @transform_6, window_bounds = array<i64: 1, 16>}, {pipeline_mode = #tpu.pipeline_mode<synchronous>, transform_indices = @transform_7, window_bounds = array<i64: 1, 16>}, {transform_indices = @transform_8, window_bounds = array<i64: 48, 16>}]} {
    %c0 = arith.constant 0 : index
    %c0_0 = arith.constant 0 : index
    %0 = vector.load %arg1[%c0, %c0_0] : memref<8x16xf32, #tpu.memory_space<vmem>>, vector<8x16xf32>
    %c0_1 = arith.constant 0 : index
    %c0_2 = arith.constant 0 : index
    %1 = vector.load %arg2[%c0_1, %c0_2] : memref<48x8xf32, #tpu.memory_space<vmem>>, vector<48x8xf32>
    %cst = arith.constant dense<0.000000e+00> : vector<48x16xf32>
    %2 = tpu.matmul %1, %0, %cst {dimension_numbers = #tpu.dot_dimension_numbers<[1], [0], [0], [1], [0, 0, 1, 1], [], []>} : vector<48x8xf32>, vector<8x16xf32>, vector<48x16xf32> -> vector<48x16xf32>
    %3 = vector.extract_strided_slice %2 {offsets = [0, 0], sizes = [8, 16], strides = [1, 1]} : vector<48x16xf32> to vector<8x16xf32>
    %4 = vector.extract_strided_slice %2 {offsets = [8, 0], sizes = [8, 16], strides = [1, 1]} : vector<48x16xf32> to vector<8x16xf32>
    %5 = vector.extract_strided_slice %2 {offsets = [16, 0], sizes = [32, 16], strides = [1, 1]} : vector<48x16xf32> to vector<32x16xf32>
    %c0_3 = arith.constant 0 : index
    %c0_4 = arith.constant 0 : index
    %6 = vector.load %arg7[%c0_3, %c0_4] : memref<1x16xf32, #tpu.memory_space<vmem>>, vector<1x16xf32>
    %c0_5 = arith.constant 0 : index
    %c0_6 = arith.constant 0 : index
    %7 = vector.load %arg8[%c0_5, %c0_6] : memref<1x16xf32, #tpu.memory_space<vmem>>, vector<1x16xf32>
    %c15_i32 = arith.constant 15 : i32
    %8 = tpu.dynamic_rotate %0 by %c15_i32 dim 1 : vector<8x16xf32>, i32 -> vector<8x16xf32>
    %9 = vector.broadcast %7 : vector<1x16xf32> to vector<8x16xf32>
    %10 = arith.mulf %8, %9 : vector<8x16xf32>
    %cst_7 = arith.constant 2.000000e+00 : f32
    %11 = vector.broadcast %cst_7 : f32 to vector<8x16xf32>
    %12 = arith.mulf %11, %0 : vector<8x16xf32>
    %13 = arith.subf %10, %12 : vector<8x16xf32>
    %c1_i32 = arith.constant 1 : i32
    %14 = tpu.dynamic_rotate %0 by %c1_i32 dim 1 : vector<8x16xf32>, i32 -> vector<8x16xf32>
    %15 = vector.broadcast %6 : vector<1x16xf32> to vector<8x16xf32>
    %16 = arith.mulf %14, %15 : vector<8x16xf32>
    %17 = arith.addf %13, %16 : vector<8x16xf32>
    %18 = arith.mulf %7, %6 : vector<1x16xf32>
    %19 = vector.broadcast %18 : vector<1x16xf32> to vector<8x16xf32>
    %20 = arith.mulf %17, %19 : vector<8x16xf32>
    %cst_8 = arith.constant 5.000000e-01 : f32
    %21 = vector.broadcast %cst_8 : f32 to vector<8x16xf32>
    %22 = arith.mulf %21, %20 : vector<8x16xf32>
    %23 = arith.addf %22, %3 : vector<8x16xf32>
    %c15_i32_9 = arith.constant 15 : i32
    %24 = tpu.dynamic_rotate %4 by %c15_i32_9 dim 1 : vector<8x16xf32>, i32 -> vector<8x16xf32>
    %25 = vector.broadcast %7 : vector<1x16xf32> to vector<8x16xf32>
    %26 = arith.mulf %24, %25 : vector<8x16xf32>
    %cst_10 = arith.constant 2.000000e+00 : f32
    %27 = vector.broadcast %cst_10 : f32 to vector<8x16xf32>
    %28 = arith.mulf %27, %4 : vector<8x16xf32>
    %29 = arith.subf %26, %28 : vector<8x16xf32>
    %c1_i32_11 = arith.constant 1 : i32
    %30 = tpu.dynamic_rotate %4 by %c1_i32_11 dim 1 : vector<8x16xf32>, i32 -> vector<8x16xf32>
    %31 = vector.broadcast %6 : vector<1x16xf32> to vector<8x16xf32>
    %32 = arith.mulf %30, %31 : vector<8x16xf32>
    %33 = arith.addf %29, %32 : vector<8x16xf32>
    %c32 = arith.constant 32 : index
    %c0_12 = arith.constant 0 : index
    %34 = vector.load %arg9[%c32, %c0_12] : memref<48x16xf32, #tpu.memory_space<vmem>>, vector<8x16xf32>
    tpu.vector_store %arg9[%c32, %c0_12], %23 {strides = array<i32>} : memref<48x16xf32, #tpu.memory_space<vmem>>, vector<8x16xf32>,
    %c40 = arith.constant 40 : index
    %c0_13 = arith.constant 0 : index
    %35 = vector.load %arg9[%c40, %c0_13] : memref<48x16xf32, #tpu.memory_space<vmem>>, vector<8x16xf32>
    tpu.vector_store %arg9[%c40, %c0_13], %33 {strides = array<i32>} : memref<48x16xf32, #tpu.memory_space<vmem>>, vector<8x16xf32>,
    %c32_14 = arith.constant 32 : index
    %c0_15 = arith.constant 0 : index
    %36 = vector.load %arg9[%c32_14, %c0_15] : memref<48x16xf32, #tpu.memory_space<vmem>>, vector<16x16xf32>
    %c0_16 = arith.constant 0 : index
    %c0_17 = arith.constant 0 : index
    %37 = vector.load %arg3[%c0_16, %c0_17] : memref<32x16xf32, #tpu.memory_space<vmem>>, vector<32x16xf32>
    %cst_18 = arith.constant dense<0.000000e+00> : vector<32x16xf32>
    %38 = tpu.matmul %37, %36, %cst_18 {dimension_numbers = #tpu.dot_dimension_numbers<[1], [0], [0], [1], [0, 0, 1, 1], [], []>} : vector<32x16xf32>, vector<16x16xf32>, vector<32x16xf32> -> vector<32x16xf32>
    %39 = arith.addf %5, %38 : vector<32x16xf32>
    %c0_19 = arith.constant 0 : index
    %c0_20 = arith.constant 0 : index
    %40 = vector.load %arg4[%c0_19, %c0_20] : memref<32x1xf32, #tpu.memory_space<vmem>>, vector<32x1xf32>
    %41 = vector.broadcast %40 : vector<32x1xf32> to vector<32x16xf32>
    %42 = arith.addf %39, %41 : vector<32x16xf32>
    %cst_21 = arith.constant 0.000000e+00 : f32
    %43 = vector.broadcast %cst_21 : f32 to vector<32x16xf32>
    %44 = arith.maximumf %42, %43 : vector<32x16xf32>
    %c0_22 = arith.constant 0 : index
    %c0_23 = arith.constant 0 : index
    %45 = vector.load %arg5[%c0_22, %c0_23] : memref<32x32xf32, #tpu.memory_space<vmem>>, vector<32x32xf32>
    %cst_24 = arith.constant dense<0.000000e+00> : vector<32x16xf32>
    %46 = tpu.matmul %45, %44, %cst_24 {dimension_numbers = #tpu.dot_dimension_numbers<[1], [0], [0], [1], [0, 0, 1, 1], [], []>} : vector<32x32xf32>, vector<32x16xf32>, vector<32x16xf32> -> vector<32x16xf32>
    %c0_25 = arith.constant 0 : index
    %c0_26 = arith.constant 0 : index
    %47 = vector.load %arg6[%c0_25, %c0_26] : memref<32x1xf32, #tpu.memory_space<vmem>>, vector<32x1xf32>
    %48 = vector.broadcast %47 : vector<32x1xf32> to vector<32x16xf32>
    %49 = arith.addf %46, %48 : vector<32x16xf32>
    %c0_27 = arith.constant 0 : index
    %c0_28 = arith.constant 0 : index
    %50 = vector.load %arg9[%c0_27, %c0_28] : memref<48x16xf32, #tpu.memory_space<vmem>>, vector<32x16xf32>
    tpu.vector_store %arg9[%c0_27, %c0_28], %49 {strides = array<i32>} : memref<48x16xf32, #tpu.memory_space<vmem>>, vector<32x16xf32>,
    return
  }
  func.func @transform_0(%arg0: i32) -> (i32, i32) {
    %c0_i32 = arith.constant 0 : i32
    %c0_i32_0 = arith.constant 0 : i32
    return %c0_i32, %arg0 : i32, i32
  }
  func.func @transform_1(%arg0: i32) -> (i32, i32) {
    %c0_i32 = arith.constant 0 : i32
    %c0_i32_0 = arith.constant 0 : i32
    %c0_i32_1 = arith.constant 0 : i32
    return %c0_i32, %c0_i32_0 : i32, i32
  }
  func.func @transform_2(%arg0: i32) -> (i32, i32) {
    %c0_i32 = arith.constant 0 : i32
    %c0_i32_0 = arith.constant 0 : i32
    %c0_i32_1 = arith.constant 0 : i32
    return %c0_i32, %c0_i32_0 : i32, i32
  }
  func.func @transform_3(%arg0: i32) -> (i32, i32) {
    %c0_i32 = arith.constant 0 : i32
    %c0_i32_0 = arith.constant 0 : i32
    %c0_i32_1 = arith.constant 0 : i32
    return %c0_i32, %c0_i32_0 : i32, i32
  }
  func.func @transform_4(%arg0: i32) -> (i32, i32) {
    %c0_i32 = arith.constant 0 : i32
    %c0_i32_0 = arith.constant 0 : i32
    %c0_i32_1 = arith.constant 0 : i32
    return %c0_i32, %c0_i32_0 : i32, i32
  }
  func.func @transform_5(%arg0: i32) -> (i32, i32) {
    %c0_i32 = arith.constant 0 : i32
    %c0_i32_0 = arith.constant 0 : i32
    %c0_i32_1 = arith.constant 0 : i32
    return %c0_i32, %c0_i32_0 : i32, i32
  }
  func.func @transform_6(%arg0: i32) -> (i32, i32) {
    %c0_i32 = arith.constant 0 : i32
    %c0_i32_0 = arith.constant 0 : i32
    %c0_i32_1 = arith.constant 0 : i32
    return %c0_i32, %c0_i32_0 : i32, i32
  }
  func.func @transform_7(%arg0: i32) -> (i32, i32) {
    %c0_i32 = arith.constant 0 : i32
    %c0_i32_0 = arith.constant 0 : i32
    %c0_i32_1 = arith.constant 0 : i32
    return %c0_i32, %c0_i32_0 : i32, i32
  }
  func.func @transform_8(%arg0: i32) -> (i32, i32) {
    %c0_i32 = arith.constant 0 : i32
    %c0_i32_0 = arith.constant 0 : i32
    return %c0_i32, %arg0 : i32, i32
  }
}

</mosaic_0001>

<llo_original>
// kernel: combined_feature_processor.1
$region0: #{combined_feature_processor.1}
  #allocation0 [shape = 'u32[]', space=smem, size = 0x4, offset = 0x4, fixed_abs, tag = 'smem constant byte address 0x4 - core index']
  #allocation1 [shape = 'u32[144,128]{1,0:T(1,128)}', space=vmem, size = 0x12000, scoped, tag = 'internal scratch']
  %s0 = inlined_call_operand.vmem [shape: f32[8,16], index: 0, kind: input, shape index: {}]
  %s1 = inlined_call_operand.vmem [shape: f32[48,8], index: 1, kind: input, shape index: {}]
  %s2 = inlined_call_operand.vmem [shape: f32[32,16], index: 2, kind: input, shape index: {}]
  %s3 = inlined_call_operand.vmem [shape: f32[32,1], index: 3, kind: input, shape index: {}]
  %s4 = inlined_call_operand.vmem [shape: f32[32,32], index: 4, kind: input, shape index: {}]
  %s5 = inlined_call_operand.vmem [shape: f32[32,1], index: 5, kind: input, shape index: {}]
  %s6 = inlined_call_operand.vmem [shape: f32[1,16], index: 6, kind: input, shape index: {}]
  %s7 = inlined_call_operand.vmem [shape: f32[1,16], index: 7, kind: input, shape index: {}]
  %s8 = inlined_call_operand.vmem [shape: f32[48,16], index: 8, kind: output, shape index: {}]
  %s9 = sld [smem:[#allocation0]]
  $region42: #{combined_feature_processor.1} parent=0
    _
  %s11 = ssub.s32 1, %s9
  %s12 = scalar_select 0, %s11, %s9
  // Predicated region
  $region2: #{combined_feature_processor.1} parent=0 // pred_check
    _
  $region3: #{combined_feature_processor.1} parent=0 // pred_check_branch
    %14 = sbr.rel (0) target = $region5
  $region4: #{combined_feature_processor.1} parent=0 // pred_region
    _
  $region5: #{combined_feature_processor.1} parent=0 // pred_fallthru
    _
  // Predicated region
  $region6: #{combined_feature_processor.1} parent=0 // pred_check
    _
  $region7: #{combined_feature_processor.1} parent=0 // pred_check_branch
    %16 = sbr.rel (0) target = $region9
  $region8: #{combined_feature_processor.1} parent=0 // pred_region
    _
  $region9: #{combined_feature_processor.1} parent=0 // pred_fallthru
    _
  // Predicated region
  $region10: #{combined_feature_processor.1} parent=0 // pred_check
    _
  $region11: #{combined_feature_processor.1} parent=0 // pred_check_branch
    %18 = sbr.rel (0) target = $region13
  $region12: #{combined_feature_processor.1} parent=0 // pred_region
    _
  $region13: #{combined_feature_processor.1} parent=0 // pred_fallthru
    _
  // Predicated region
  $region14: #{combined_feature_processor.1} parent=0 // pred_check
    _
  $region15: #{combined_feature_processor.1} parent=0 // pred_check_branch
    %20 = sbr.rel (0) target = $region17
  $region16: #{combined_feature_processor.1} parent=0 // pred_region
    _
  $region17: #{combined_feature_processor.1} parent=0 // pred_fallthru
    _
  // Predicated region
  $region18: #{combined_feature_processor.1} parent=0 // pred_check
    _
  $region19: #{combined_feature_processor.1} parent=0 // pred_check_branch
    %22 = sbr.rel (0) target = $region21
  $region20: #{combined_feature_processor.1} parent=0 // pred_region
    _
  $region21: #{combined_feature_processor.1} parent=0 // pred_fallthru
    _
  // Predicated region
  $region22: #{combined_feature_processor.1} parent=0 // pred_check
    _
  $region23: #{combined_feature_processor.1} parent=0 // pred_check_branch
    %24 = sbr.rel (0) target = $region25
  $region24: #{combined_feature_processor.1} parent=0 // pred_region
    _
  $region25: #{combined_feature_processor.1} parent=0 // pred_fallthru
    _
  // Predicated region
  $region26: #{combined_feature_processor.1} parent=0 // pred_check
    _
  $region27: #{combined_feature_processor.1} parent=0 // pred_check_branch
    %26 = sbr.rel (0) target = $region29
  $region28: #{combined_feature_processor.1} parent=0 // pred_region
    _
  $region29: #{combined_feature_processor.1} parent=0 // pred_fallthru
    _
  // Predicated region
  $region30: #{combined_feature_processor.1} parent=0 // pred_check
    _
  $region31: #{combined_feature_processor.1} parent=0 // pred_check_branch
    %28 = sbr.rel (0) target = $region33
  $region32: #{combined_feature_processor.1} parent=0 // pred_region
    _
  $region33: #{combined_feature_processor.1} parent=0 // pred_fallthru
    _
  %v29 = vld [vmem:[%s0] sm:$0xff]
  %v30 = vld [vmem:[%s1] sm:$0xff]
  %v31 = vld [vmem:[%s1 + $0x8] sm:$0xff]
  %v32 = vld [vmem:[%s1 + $0x10] sm:$0xff]
  %v33 = vld [vmem:[%s1 + $0x18] sm:$0xff]
  %v34 = vld [vmem:[%s1 + $0x20] sm:$0xff]
  %v35 = vld [vmem:[%s1 + $0x28] sm:$0xff]
  %vm36 = vcmask 64512
  %v38 = vsel %vm36, %v30, 0
  %v41 = vsel %vm36, %v31, 0
  %v44 = vsel %vm36, %v32, 0
  %v47 = vsel %vm36, %v33, 0
  %v50 = vsel %vm36, %v34, 0
  %v53 = vsel %vm36, %v35, 0
  %55 = vmatprep.subr.mxu0 0.0
  %56 = vmatpush1.msra.mxu0 0.0
  %57 = vmatprep.subr.mxu0 0.0
  %58 = vmatpush1.msra.mxu0 0.0
  %59 = vmatprep.subr.mxu0 0.0
  %60 = vmatpush1.msra.mxu0 0.0
  %61 = vmatprep.subr.mxu0 0.0
  %62 = vmatpush1.msra.mxu0 0.0
  %63 = vmatprep.subr.mxu0 0.0
  %64 = vmatpush1.msra.mxu0 0.0
  %65 = vmatprep.subr.mxu0 0.0
  %66 = vmatpush1.msra.mxu0 0.0
  %67 = vmatprep.subr.mxu0 0.0
  %68 = vmatpush1.msra.mxu0 0.0
  %69 = vmatprep.subr.mxu0 0.0
  %70 = vmatpush1.msra.mxu0 0.0
  %71 = vmatprep.subr.mxu0 0.0
  %72 = vmatpush1.msra.mxu0 0.0
  %73 = vmatprep.subr.mxu0 0.0
  %74 = vmatpush1.msra.mxu0 0.0
  %75 = vmatprep.subr.mxu0 0.0
  %76 = vmatpush1.msra.mxu0 0.0
  %77 = vmatprep.subr.mxu0 0.0
  %78 = vmatpush1.msra.mxu0 0.0
  %79 = vmatprep.subr.mxu0 0.0
  %80 = vmatpush1.msra.mxu0 0.0
  %81 = vmatprep.subr.mxu0 0.0
  %82 = vmatpush1.msra.mxu0 0.0
  %83 = vmatprep.subr.mxu0 0.0
  %84 = vmatpush1.msra.mxu0 0.0
  %85 = vmatprep.subr.mxu0 0.0
  %86 = vmatpush1.msra.mxu0 %v29
  %87 = vmatprep.subr.mxu0 0.0
  %88 = vmatpush2.msra.mxu0 0.0
  %89 = vmatprep.subr.mxu0 0.0
  %90 = vmatpush2.msra.mxu0 0.0
  %91 = vmatprep.subr.mxu0 0.0
  %92 = vmatpush2.msra.mxu0 0.0
  %93 = vmatprep.subr.mxu0 0.0
  %94 = vmatpush2.msra.mxu0 0.0
  %95 = vmatprep.subr.mxu0 0.0
  %96 = vmatpush2.msra.mxu0 0.0
  %97 = vmatprep.subr.mxu0 0.0
  %98 = vmatpush2.msra.mxu0 0.0
  %99 = vmatprep.subr.mxu0 0.0
  %100 = vmatpush2.msra.mxu0 0.0
  %101 = vmatprep.subr.mxu0 0.0
  %102 = vmatpush2.msra.mxu0 0.0
  %103 = vmatprep.subr.mxu0 0.0
  %104 = vmatpush2.msra.mxu0 0.0
  %105 = vmatprep.subr.mxu0 0.0
  %106 = vmatpush2.msra.mxu0 0.0
  %107 = vmatprep.subr.mxu0 0.0
  %108 = vmatpush2.msra.mxu0 0.0
  %109 = vmatprep.subr.mxu0 0.0
  %110 = vmatpush2.msra.mxu0 0.0
  %111 = vmatprep.subr.mxu0 0.0
  %112 = vmatpush2.msra.mxu0 0.0
  %113 = vmatprep.subr.mxu0 0.0
  %114 = vmatpush2.msra.mxu0 0.0
  %115 = vmatprep.subr.mxu0 0.0
  %116 = vmatpush2.msra.mxu0 0.0
  %117 = vmatprep.subr.mxu0 0.0
  %118 = vmatpush2.msra.mxu0 0.0
  %119 = vmatprep.mubr.f32.mxu0 0.0
  %120 = vmatmul.mubr.f32.gmra.mxu0 %v38
  %v121 = vpop.f32.mrf.mxu0
  %v122 = vadd.f32 0.0, %v121
  %v123 = vpop.f32.mrf.mxu0
  %124 = vmatprep.mubr.f32.mxu0 0.0
  %125 = vmatmul.mubr.f32.gmra.mxu0 %v41
  %v126 = vpop.f32.mrf.mxu0
  %v127 = vadd.f32 0.0, %v126
  %v128 = vpop.f32.mrf.mxu0
  %129 = vmatprep.mubr.f32.mxu0 0.0
  %130 = vmatmul.mubr.f32.gmra.mxu0 %v44
  %v131 = vpop.f32.mrf.mxu0
  %v132 = vadd.f32 0.0, %v131
  %v133 = vpop.f32.mrf.mxu0
  %134 = vmatprep.mubr.f32.mxu0 0.0
  %135 = vmatmul.mubr.f32.gmra.mxu0 %v47
  %v136 = vpop.f32.mrf.mxu0
  %v137 = vadd.f32 0.0, %v136
  %v138 = vpop.f32.mrf.mxu0
  %139 = vmatprep.mubr.f32.mxu0 0.0
  %140 = vmatmul.mubr.f32.gmra.mxu0 %v50
  %v141 = vpop.f32.mrf.mxu0
  %v142 = vadd.f32 0.0, %v141
  %v143 = vpop.f32.mrf.mxu0
  %144 = vmatprep.mubr.f32.mxu0 0.0
  %145 = vmatmul.mubr.f32.gmra.mxu0 %v53
  %v146 = vpop.f32.mrf.mxu0
  %v147 = vadd.f32 0.0, %v146
  %v148 = vpop.f32.mrf.mxu0
  %149 = vdwg.mxu0
  %v150 = vld [vmem:[%s6] sm:$0x1]
  %v151 = vld [vmem:[%s7] sm:$0x1]
  %vm152 = vcmask 1047680
  %153 = vrot.lane.b32.xlu0 %v29, 16
  %v154 = vpop.permute.xlu0 %153
  %v155 = vsel %vm152, %v154, %v29
  %156 = vrot.lane.b32.xlu0 %v155, 16
  %v157 = vpop.permute.xlu0 %156
  %v158 = vsel %vm152, %v157, %v29
  %v160 = vlaneseq
  %v161 = vshrl.u32 %v160, 7
  %v162 = vsub.s32 0, %v161
  %v163 = vrot.slane %v151, %v162
  %164 = vrot.lane.b32.xlu0 %v163, 1
  %v165 = vpop.permute.xlu0 %164
  %v167 = vmul.f32 %v158, %v165
  %v168 = vmul.f32 %v29, 2.0
  %170 = vrot.lane.b32.xlu0 %v168, 1
  %v171 = vpop.permute.xlu0 %170
  %v173 = vsub.f32 %v167, %v171
  %v175 = vlaneseq
  %v176 = vshrl.u32 %v175, 7
  %v177 = vsub.s32 0, %v176
  %v178 = vrot.slane %v150, %v177
  %179 = vrot.lane.b32.xlu0 %v178, 15
  %v180 = vpop.permute.xlu0 %179
  %v182 = vmul.f32 %v158, %v180
  %184 = vrot.lane.b32.xlu0 %v182, 114
  %v185 = vpop.permute.xlu0 %184
  %v187 = vadd.f32 %v173, %v185
  %v188 = vmul.f32 %v151, %v150
  %v190 = vlaneseq
  %v191 = vshrl.u32 %v190, 7
  %v192 = vsub.s32 0, %v191
  %v193 = vrot.slane %v188, %v192
  %194 = vrot.lane.b32.xlu0 %v193, 1
  %v195 = vpop.permute.xlu0 %194
  %v197 = vmul.f32 %v187, %v195
  %v198 = vmul.f32 %v197, 0.5
  %200 = vrot.lane.b32.xlu0 %v122, 1
  %v201 = vpop.permute.xlu0 %200
  %v203 = vadd.f32 %v198, %v201
  %204 = vrot.lane.b32.xlu0 %v127, 16
  %v205 = vpop.permute.xlu0 %204
  %v206 = vsel %vm152, %v205, %v127
  %207 = vrot.lane.b32.xlu0 %v206, 16
  %v208 = vpop.permute.xlu0 %207
  %v209 = vsel %vm152, %v208, %v127
  %v210 = vmul.f32 %v209, %v165
  %v211 = vmul.f32 %v127, 2.0
  %213 = vrot.lane.b32.xlu0 %v211, 1
  %v214 = vpop.permute.xlu0 %213
  %v216 = vsub.f32 %v210, %v214
  %v217 = vmul.f32 %v209, %v180
  %219 = vrot.lane.b32.xlu0 %v217, 114
  %v220 = vpop.permute.xlu0 %219
  %v222 = vadd.f32 %v216, %v220
  %224 = vrot.lane.b32.xlu0 %v203, 127
  %v225 = vpop.permute.xlu0 %224
  %vm227 = vcmask 130048
  %228 = vst.msk [vmem:[%s8 + $0x20] sm:$0xff] %vm227, %v225
  %230 = vrot.lane.b32.xlu0 %v222, 127
  %v231 = vpop.permute.xlu0 %230
  %233 = vst.msk [vmem:[%s8 + $0x28] sm:$0xff] %vm227, %v231
  %v234 = vld [vmem:[%s8 + $0x20] sm:$0xff]
  %v235 = vld [vmem:[%s8 + $0x28] sm:$0xff]
  %v236 = vld [vmem:[%s2] sm:$0xff]
  %v237 = vld [vmem:[%s2 + $0x8] sm:$0xff]
  %v238 = vld [vmem:[%s2 + $0x10] sm:$0xff]
  %v239 = vld [vmem:[%s2 + $0x18] sm:$0xff]
  %v241 = vsel %vm227, %v236, 0
  %v244 = vsel %vm227, %v237, 0
  %v247 = vsel %vm227, %v238, 0
  %v250 = vsel %vm227, %v239, 0
  %252 = vmatprep.subr.mxu0 0.0
  %253 = vmatpush1.msra.mxu0 0.0
  %254 = vmatprep.subr.mxu0 0.0
  %255 = vmatpush1.msra.mxu0 0.0
  %256 = vmatprep.subr.mxu0 0.0
  %257 = vmatpush1.msra.mxu0 0.0
  %258 = vmatprep.subr.mxu0 0.0
  %259 = vmatpush1.msra.mxu0 0.0
  %260 = vmatprep.subr.mxu0 0.0
  %261 = vmatpush1.msra.mxu0 0.0
  %262 = vmatprep.subr.mxu0 0.0
  %263 = vmatpush1.msra.mxu0 0.0
  %264 = vmatprep.subr.mxu0 0.0
  %265 = vmatpush1.msra.mxu0 0.0
  %266 = vmatprep.subr.mxu0 0.0
  %267 = vmatpush1.msra.mxu0 0.0
  %268 = vmatprep.subr.mxu0 0.0
  %269 = vmatpush1.msra.mxu0 0.0
  %270 = vmatprep.subr.mxu0 0.0
  %271 = vmatpush1.msra.mxu0 0.0
  %272 = vmatprep.subr.mxu0 0.0
  %273 = vmatpush1.msra.mxu0 0.0
  %274 = vmatprep.subr.mxu0 0.0
  %275 = vmatpush1.msra.mxu0 0.0
  %276 = vmatprep.subr.mxu0 0.0
  %277 = vmatpush1.msra.mxu0 0.0
  %278 = vmatprep.subr.mxu0 0.0
  %279 = vmatpush1.msra.mxu0 0.0
  %280 = vmatprep.subr.mxu0 0.0
  %281 = vmatpush1.msra.mxu0 %v235
  %282 = vmatprep.subr.mxu0 0.0
  %283 = vmatpush1.msra.mxu0 %v234
  %284 = vmatprep.subr.mxu0 0.0
  %285 = vmatpush2.msra.mxu0 0.0
  %286 = vmatprep.subr.mxu0 0.0
  %287 = vmatpush2.msra.mxu0 0.0
  %288 = vmatprep.subr.mxu0 0.0
  %289 = vmatpush2.msra.mxu0 0.0
  %290 = vmatprep.subr.mxu0 0.0
  %291 = vmatpush2.msra.mxu0 0.0
  %292 = vmatprep.subr.mxu0 0.0
  %293 = vmatpush2.msra.mxu0 0.0
  %294 = vmatprep.subr.mxu0 0.0
  %295 = vmatpush2.msra.mxu0 0.0
  %296 = vmatprep.subr.mxu0 0.0
  %297 = vmatpush2.msra.mxu0 0.0
  %298 = vmatprep.subr.mxu0 0.0
  %299 = vmatpush2.msra.mxu0 0.0
  %300 = vmatprep.subr.mxu0 0.0
  %301 = vmatpush2.msra.mxu0 0.0
  %302 = vmatprep.subr.mxu0 0.0
  %303 = vmatpush2.msra.mxu0 0.0
  %304 = vmatprep.subr.mxu0 0.0
  %305 = vmatpush2.msra.mxu0 0.0
  %306 = vmatprep.subr.mxu0 0.0
  %307 = vmatpush2.msra.mxu0 0.0
  %308 = vmatprep.subr.mxu0 0.0
  %309 = vmatpush2.msra.mxu0 0.0
  %310 = vmatprep.subr.mxu0 0.0
  %311 = vmatpush2.msra.mxu0 0.0
  %312 = vmatprep.subr.mxu0 0.0
  %313 = vmatpush2.msra.mxu0 0.0
  %314 = vmatprep.subr.mxu0 0.0
  %315 = vmatpush2.msra.mxu0 0.0
  %316 = vmatprep.mubr.f32.mxu0 0.0
  %317 = vmatmul.mubr.f32.gmra.mxu0 %v241
  %v318 = vpop.f32.mrf.mxu0
  %v319 = vadd.f32 0.0, %v318
  %v320 = vpop.f32.mrf.mxu0
  %321 = vmatprep.mubr.f32.mxu0 0.0
  %322 = vmatmul.mubr.f32.gmra.mxu0 %v244
  %v323 = vpop.f32.mrf.mxu0
  %v324 = vadd.f32 0.0, %v323
  %v325 = vpop.f32.mrf.mxu0
  %326 = vmatprep.mubr.f32.mxu0 0.0
  %327 = vmatmul.mubr.f32.gmra.mxu0 %v247
  %v328 = vpop.f32.mrf.mxu0
  %v329 = vadd.f32 0.0, %v328
  %v330 = vpop.f32.mrf.mxu0
  %331 = vmatprep.mubr.f32.mxu0 0.0
  %332 = vmatmul.mubr.f32.gmra.mxu0 %v250
  %v333 = vpop.f32.mrf.mxu0
  %v334 = vadd.f32 0.0, %v333
  %v335 = vpop.f32.mrf.mxu0
  %336 = vdwg.mxu0
  %v337 = vadd.f32 %v132, %v319
  %v338 = vadd.f32 %v137, %v324
  %v339 = vadd.f32 %v142, %v329
  %v340 = vadd.f32 %v147, %v334
  %v341 = vld [vmem:[%s3] sm:$0xff]
  %v342 = vld [vmem:[%s3 + $0x8] sm:$0xff]
  %v343 = vld [vmem:[%s3 + $0x10] sm:$0xff]
  %v344 = vld [vmem:[%s3 + $0x18] sm:$0xff]
  %346 = vset.pattern.permute.xlu0 0
  %347 = vperm.xlu0 %346, %v341
  %v348 = vpop.permute.xlu0 %347
  %351 = vset.pattern.permute.xlu0 0
  %352 = vperm.xlu0 %351, %v342
  %v353 = vpop.permute.xlu0 %352
  %356 = vset.pattern.permute.xlu0 0
  %357 = vperm.xlu0 %356, %v343
  %v358 = vpop.permute.xlu0 %357
  %361 = vset.pattern.permute.xlu0 0
  %362 = vperm.xlu0 %361, %v344
  %v363 = vpop.permute.xlu0 %362
  %v365 = vadd.f32 %v337, %v348
  %v366 = vadd.f32 %v338, %v353
  %v367 = vadd.f32 %v339, %v358
  %v368 = vadd.f32 %v340, %v363
  %v369 = vmax.f32 %v365, 0.0
  %v370 = vmax.f32 %v366, 0.0
  %v371 = vmax.f32 %v367, 0.0
  %v372 = vmax.f32 %v368, 0.0
  %v373 = vld [vmem:[%s4] sm:$0xff]
  %v374 = vld [vmem:[%s4 + $0x8] sm:$0xff]
  %v375 = vld [vmem:[%s4 + $0x10] sm:$0xff]
  %v376 = vld [vmem:[%s4 + $0x18] sm:$0xff]
  %v377 = vld [vmem:[%s5] sm:$0xff]
  %v378 = vld [vmem:[%s5 + $0x8] sm:$0xff]
  %v379 = vld [vmem:[%s5 + $0x10] sm:$0xff]
  %v380 = vld [vmem:[%s5 + $0x18] sm:$0xff]
  %382 = vset.pattern.permute.xlu0 0
  %383 = vperm.xlu0 %382, %v377
  %v384 = vpop.permute.xlu0 %383
  %387 = vset.pattern.permute.xlu0 0
  %388 = vperm.xlu0 %387, %v378
  %v389 = vpop.permute.xlu0 %388
  %392 = vset.pattern.permute.xlu0 0
  %393 = vperm.xlu0 %392, %v379
  %v394 = vpop.permute.xlu0 %393
  %397 = vset.pattern.permute.xlu0 0
  %398 = vperm.xlu0 %397, %v380
  %v399 = vpop.permute.xlu0 %398
  %vm401 = vcmask 261120
  %v403 = vsel %vm401, %v373, 0
  %v406 = vsel %vm401, %v374, 0
  %v409 = vsel %vm401, %v375, 0
  %v412 = vsel %vm401, %v376, 0
  %414 = vmatprep.subr.mxu0 0.0
  %415 = vmatpush1.msra.mxu0 0.0
  %416 = vmatprep.subr.mxu0 0.0
  %417 = vmatpush1.msra.mxu0 0.0
  %418 = vmatprep.subr.mxu0 0.0
  %419 = vmatpush1.msra.mxu0 0.0
  %420 = vmatprep.subr.mxu0 0.0
  %421 = vmatpush1.msra.mxu0 0.0
  %422 = vmatprep.subr.mxu0 0.0
  %423 = vmatpush1.msra.mxu0 0.0
  %424 = vmatprep.subr.mxu0 0.0
  %425 = vmatpush1.msra.mxu0 0.0
  %426 = vmatprep.subr.mxu0 0.0
  %427 = vmatpush1.msra.mxu0 0.0
  %428 = vmatprep.subr.mxu0 0.0
  %429 = vmatpush1.msra.mxu0 0.0
  %430 = vmatprep.subr.mxu0 0.0
  %431 = vmatpush1.msra.mxu0 0.0
  %432 = vmatprep.subr.mxu0 0.0
  %433 = vmatpush1.msra.mxu0 0.0
  %434 = vmatprep.subr.mxu0 0.0
  %435 = vmatpush1.msra.mxu0 0.0
  %436 = vmatprep.subr.mxu0 0.0
  %437 = vmatpush1.msra.mxu0 0.0
  %438 = vmatprep.subr.mxu0 0.0
  %439 = vmatpush1.msra.mxu0 %v372
  %440 = vmatprep.subr.mxu0 0.0
  %441 = vmatpush1.msra.mxu0 %v371
  %442 = vmatprep.subr.mxu0 0.0
  %443 = vmatpush1.msra.mxu0 %v370
  %444 = vmatprep.subr.mxu0 0.0
  %445 = vmatpush1.msra.mxu0 %v369
  %446 = vmatprep.subr.mxu0 0.0
  %447 = vmatpush2.msra.mxu0 0.0
  %448 = vmatprep.subr.mxu0 0.0
  %449 = vmatpush2.msra.mxu0 0.0
  %450 = vmatprep.subr.mxu0 0.0
  %451 = vmatpush2.msra.mxu0 0.0
  %452 = vmatprep.subr.mxu0 0.0
  %453 = vmatpush2.msra.mxu0 0.0
  %454 = vmatprep.subr.mxu0 0.0
  %455 = vmatpush2.msra.mxu0 0.0
  %456 = vmatprep.subr.mxu0 0.0
  %457 = vmatpush2.msra.mxu0 0.0
  %458 = vmatprep.subr.mxu0 0.0
  %459 = vmatpush2.msra.mxu0 0.0
  %460 = vmatprep.subr.mxu0 0.0
  %461 = vmatpush2.msra.mxu0 0.0
  %462 = vmatprep.subr.mxu0 0.0
  %463 = vmatpush2.msra.mxu0 0.0
  %464 = vmatprep.subr.mxu0 0.0
  %465 = vmatpush2.msra.mxu0 0.0
  %466 = vmatprep.subr.mxu0 0.0
  %467 = vmatpush2.msra.mxu0 0.0
  %468 = vmatprep.subr.mxu0 0.0
  %469 = vmatpush2.msra.mxu0 0.0
  %470 = vmatprep.subr.mxu0 0.0
  %471 = vmatpush2.msra.mxu0 0.0
  %472 = vmatprep.subr.mxu0 0.0
  %473 = vmatpush2.msra.mxu0 0.0
  %474 = vmatprep.subr.mxu0 0.0
  %475 = vmatpush2.msra.mxu0 0.0
  %476 = vmatprep.subr.mxu0 0.0
  %477 = vmatpush2.msra.mxu0 0.0
  %478 = vmatprep.mubr.f32.mxu0 0.0
  %479 = vmatmul.mubr.f32.gmra.mxu0 %v403
  %v480 = vpop.f32.mrf.mxu0
  %v481 = vadd.f32 %v384, %v480
  %v482 = vpop.f32.mrf.mxu0
  %483 = vmatprep.mubr.f32.mxu0 0.0
  %484 = vmatmul.mubr.f32.gmra.mxu0 %v406
  %v485 = vpop.f32.mrf.mxu0
  %v486 = vadd.f32 %v389, %v485
  %v487 = vpop.f32.mrf.mxu0
  %488 = vmatprep.mubr.f32.mxu0 0.0
  %489 = vmatmul.mubr.f32.gmra.mxu0 %v409
  %v490 = vpop.f32.mrf.mxu0
  %v491 = vadd.f32 %v394, %v490
  %v492 = vpop.f32.mrf.mxu0
  %493 = vmatprep.mubr.f32.mxu0 0.0
  %494 = vmatmul.mubr.f32.gmra.mxu0 %v412
  %v495 = vpop.f32.mrf.mxu0
  %v496 = vadd.f32 %v399, %v495
  %v497 = vpop.f32.mrf.mxu0
  %498 = vdwg.mxu0
  %499 = vst.msk [vmem:[%s8] sm:$0xff] %vm227, %v481
  %500 = vst.msk [vmem:[%s8 + $0x8] sm:$0xff] %vm227, %v486
  %501 = vst.msk [vmem:[%s8 + $0x10] sm:$0xff] %vm227, %v491
  %502 = vst.msk [vmem:[%s8 + $0x18] sm:$0xff] %vm227, %v496
  // Predicated region
  $region34: #{combined_feature_processor.1} parent=0 // pred_check
    _
  $region35: #{combined_feature_processor.1} parent=0 // pred_check_branch
    %504 = sbr.rel (0) target = $region37
  $region36: #{combined_feature_processor.1} parent=0 // pred_region
    _
  $region37: #{combined_feature_processor.1} parent=0 // pred_fallthru
    _
  // Predicated region
  $region38: #{combined_feature_processor.1} parent=0 // pred_check
    _
  $region39: #{combined_feature_processor.1} parent=0 // pred_check_branch
    %506 = sbr.rel (0) target = $region41
  $region40: #{combined_feature_processor.1} parent=0 // pred_region
    _
  $region41: #{combined_feature_processor.1} parent=0 // pred_fallthru
    _

</llo_original>
